<compile_context>
chip_gen: v7x
topology: tpu7x:2x2x1
jax: 0.10.0
libtpu: 0.0.40
codegen_flags: <defaults>
</compile_context>

<pallas_src>
import functools
import math

import jax
import jax.numpy as jnp
from jax import lax
from jax.experimental import pallas as pl
from jax.experimental.pallas import tpu as pltpu

_VMEM_LIMIT = 64 * 1024 * 1024   # explicit scoped-VMEM budget (fits v7x 64 MiB/TC)
_LN_EPS = 1e-5


# ----------------------------------------------------------------------------
# helpers
# ----------------------------------------------------------------------------
def _round_up(x, m):
    return (x + m - 1) // m * m


def _row_tiling(m, tm_target):
    """Row tile: as large as requested (default 256, MXU-friendly), clamped and
    8-aligned for small problems. Returns (tm, padded_M)."""
    tm = min(tm_target, _round_up(m, 8))
    return tm, _round_up(m, tm)


def _largest_divisor_leq(n, cap):
    for t in range(min(cap, n), 0, -1):
        if n % t == 0:
            return t
    return 1


def _pad_rows(a, mp):
    m = a.shape[0]
    if mp == m:
        return a
    return jnp.pad(a, ((0, mp - m), (0, 0)))


def _cparams(dims):
    return pltpu.CompilerParams(dimension_semantics=dims,
                                vmem_limit_bytes=_VMEM_LIMIT)


def _layernorm_f32(x_f32, g_ref, b_ref):
    mu = jnp.mean(x_f32, axis=-1, keepdims=True)
    var = jnp.mean(jnp.square(x_f32 - mu), axis=-1, keepdims=True)
    xn = (x_f32 - mu) * lax.rsqrt(var + _LN_EPS)
    return xn * g_ref[...].astype(jnp.float32) + b_ref[...].astype(jnp.float32)


# ----------------------------------------------------------------------------
# kernels
# ----------------------------------------------------------------------------
def _ln_qkv_kernel(x_ref, g_ref, b_ref, w_ref, bqkv_ref, o_ref):
    # LN1(x) @ W_qkv + b_qkv, per (tm, d_model) row tile.
    xn = _layernorm_f32(x_ref[...].astype(jnp.float32), g_ref, b_ref)
    qkv = jnp.dot(xn.astype(w_ref.dtype), w_ref[...],
                  preferred_element_type=jnp.float32)
    o_ref[...] = (qkv + bqkv_ref[...].astype(jnp.float32)).astype(o_ref.dtype)


def _attn_kernel(q_ref, k_ref, v_ref, o_ref, *, scale):
    # A block of (tbh, S, Dh) (batch*head) slices -> (tbh, S, Dh) context.
    q = q_ref[...]
    k = k_ref[...]
    v = v_ref[...]
    s = jnp.einsum('bqd,bkd->bqk', q, k,
                   preferred_element_type=jnp.float32) * scale
    s = s - jnp.max(s, axis=-1, keepdims=True)
    p = jnp.exp(s)
    w = p / jnp.sum(p, axis=-1, keepdims=True)
    ctx = jnp.einsum('bqk,bkd->bqd', w.astype(v.dtype), v,
                     preferred_element_type=jnp.float32)
    o_ref[...] = ctx.astype(o_ref.dtype)


def _out_proj_residual_kernel(ctx_ref, w_ref, b_ref, res_ref, o_ref):
    # x + (context @ W_o + b_o), per row tile.
    y = jnp.dot(ctx_ref[...], w_ref[...], preferred_element_type=jnp.float32)
    y = y + b_ref[...].astype(jnp.float32)
    o_ref[...] = (res_ref[...].astype(jnp.float32) + y).astype(o_ref.dtype)


def _ln_ffn_residual_kernel(x_ref, g_ref, b_ref, w1_ref, b1_ref, w2_ref, b2_ref,
                            o_ref, xn_ref, acc_ref):
    # Grid: (row tiles [parallel], d_ff tiles [arbitrary, last]).
    f = pl.program_id(1)

    @pl.when(f == 0)
    def _():
        # LayerNorm2 once per row tile, cached in VMEM for every d_ff slice.
        xn = _layernorm_f32(x_ref[...].astype(jnp.float32), g_ref, b_ref)
        xn_ref[...] = xn.astype(xn_ref.dtype)
        acc_ref[...] = jnp.zeros_like(acc_ref)

    # fc1 slice (native-dtype operands, f32 accumulation) + exact-erf GELU.
    h = jnp.dot(xn_ref[...], w1_ref[...], preferred_element_type=jnp.float32)
    h = h + b1_ref[...].astype(jnp.float32)
    h = 0.5 * h * (1.0 + lax.erf(h * (1.0 / math.sqrt(2.0))))
    # fc2 slice, accumulated in a VMEM f32 scratch.
    acc_ref[...] += jnp.dot(h.astype(w2_ref.dtype), w2_ref[...],
                            preferred_element_type=jnp.float32)

    @pl.when(f == pl.num_programs(1) - 1)
    def _():
        y = acc_ref[...] + b2_ref[...].astype(jnp.float32)
        o_ref[...] = (x_ref[...].astype(jnp.float32) + y).astype(o_ref.dtype)


# ----------------------------------------------------------------------------
# wrappers
# ----------------------------------------------------------------------------
def _ln_qkv(x2d, g, b, w, bq, *, tm_target):
    m, d = x2d.shape
    p = w.shape[1]
    tm, mp = _row_tiling(m, tm_target)
    xp = _pad_rows(x2d, mp)
    out = pl.pallas_call(
        _ln_qkv_kernel,
        out_shape=jax.ShapeDtypeStruct((mp, p), x2d.dtype),
        grid_spec=pltpu.PrefetchScalarGridSpec(
            num_scalar_prefetch=0,
            grid=(mp // tm,),
            in_specs=[
                pl.BlockSpec((tm, d), lambda i: (i, 0)),
                pl.BlockSpec((1, d), lambda i: (0, 0)),
                pl.BlockSpec((1, d), lambda i: (0, 0)),
                pl.BlockSpec((d, p), lambda i: (0, 0)),
                pl.BlockSpec((1, p), lambda i: (0, 0)),
            ],
            out_specs=pl.BlockSpec((tm, p), lambda i: (i, 0)),
        ),
        compiler_params=_cparams(("parallel",)),
    )(xp, g.reshape(1, d), b.reshape(1, d), w, bq.reshape(1, p))
    return out[:m]


def _attention(q, k, v, *, tbh_target=8):
    # q, k, v: (B, H, S, Dh)
    bsz, h, s, dh = q.shape
    bh = bsz * h
    tbh = _largest_divisor_leq(bh, tbh_target)
    qf = q.reshape(bh, s, dh)
    kf = k.reshape(bh, s, dh)
    vf = v.reshape(bh, s, dh)
    kernel = functools.partial(_attn_kernel, scale=1.0 / math.sqrt(dh))
    out = pl.pallas_call(
        kernel,
        out_shape=jax.ShapeDtypeStruct((bh, s, dh), q.dtype),
        grid_spec=pltpu.PrefetchScalarGridSpec(
            num_scalar_prefetch=0,
            grid=(bh // tbh,),
            in_specs=[pl.BlockSpec((tbh, s, dh), lambda i: (i, 0, 0))] * 3,
            out_specs=pl.BlockSpec((tbh, s, dh), lambda i: (i, 0, 0)),
        ),
        compiler_params=_cparams(("parallel",)),
    )(qf, kf, vf)
    return out.reshape(bsz, h, s, dh)


def _out_proj_residual(ctx2d, w, b, res2d, *, tm_target):
    m, hd = ctx2d.shape
    d = w.shape[1]
    tm, mp = _row_tiling(m, tm_target)
    ctxp = _pad_rows(ctx2d, mp)
    resp = _pad_rows(res2d, mp)
    out = pl.pallas_call(
        _out_proj_residual_kernel,
        out_shape=jax.ShapeDtypeStruct((mp, d), res2d.dtype),
        grid_spec=pltpu.PrefetchScalarGridSpec(
            num_scalar_prefetch=0,
            grid=(mp // tm,),
            in_specs=[
                pl.BlockSpec((tm, hd), lambda i: (i, 0)),
                pl.BlockSpec((hd, d), lambda i: (0, 0)),
                pl.BlockSpec((1, d), lambda i: (0, 0)),
                pl.BlockSpec((tm, d), lambda i: (i, 0)),
            ],
            out_specs=pl.BlockSpec((tm, d), lambda i: (i, 0)),
        ),
        compiler_params=_cparams(("parallel",)),
    )(ctxp, w, b.reshape(1, d), resp)
    return out[:m]


def _ln2_ffn_residual(x2d, g, b, w1, b1, w2, b2, *, tm_target, tf_target):
    m, d = x2d.shape
    d_ff = w1.shape[1]
    tm, mp = _row_tiling(m, tm_target)
    # Tile d_ff only when it is cleanly divisible by a 128-multiple tile.
    if d_ff > tf_target and d_ff % tf_target == 0 and tf_target % 128 == 0:
        tf = tf_target
    else:
        tf = d_ff
    xp = _pad_rows(x2d, mp)

    itemsize = jnp.dtype(x2d.dtype).itemsize
    cost = pl.CostEstimate(
        flops=4 * mp * d * d_ff,
        transcendentals=mp * d_ff,
        bytes_accessed=itemsize * (2 * mp * d + 2 * d * d_ff + d_ff + 2 * d),
    )

    out = pl.pallas_call(
        _ln_ffn_residual_kernel,
        out_shape=jax.ShapeDtypeStruct((mp, d), x2d.dtype),
        grid_spec=pltpu.PrefetchScalarGridSpec(
            num_scalar_prefetch=0,
            grid=(mp // tm, d_ff // tf),
            in_specs=[
                pl.BlockSpec((tm, d), lambda i, f: (i, 0)),    # x (resident over f)
                pl.BlockSpec((1, d), lambda i, f: (0, 0)),     # ln2 gamma
                pl.BlockSpec((1, d), lambda i, f: (0, 0)),     # ln2 beta
                pl.BlockSpec((d, tf), lambda i, f: (0, f)),    # W1 slice
                pl.BlockSpec((1, tf), lambda i, f: (0, f)),    # b1 slice
                pl.BlockSpec((tf, d), lambda i, f: (f, 0)),    # W2 slice
                pl.BlockSpec((1, d), lambda i, f: (0, 0)),     # b2
            ],
            out_specs=pl.BlockSpec((tm, d), lambda i, f: (i, 0)),
            scratch_shapes=[
                pltpu.VMEM((tm, d), x2d.dtype),    # cached LN2(x) tile
                pltpu.VMEM((tm, d), jnp.float32),  # f32 accumulator
            ],
        ),
        compiler_params=_cparams(("parallel", "arbitrary")),
        cost_estimate=cost,
    )(xp, g.reshape(1, d), b.reshape(1, d), w1, b1.reshape(1, d_ff), w2,
      b2.reshape(1, d))
    return out[:m]


def transformer_block(x, params, attn_mask=None, *, tm_target=256, tf_target=512):
    """x: (batch, seq, d_model) -> (batch, seq, d_model). Eval-mode forward."""
    if attn_mask is not None:
        raise NotImplementedError("attn_mask not supported")  # TODO(synk): mask
    bsz, seq, d = x.shape
    h, dh = params["n_heads"], params["d_head"]
    m = bsz * seq
    x2d = x.reshape(m, d)

    # LN1 + QKV projection (per-head interleaved [q_h,k_h,v_h] layout, exactly
    # matching torch's view(B,S,H,3*Dh) + chunk).
    qkv = _ln_qkv(x2d, params["ln1_g"], params["ln1_b"],
                  params["w_qkv"], params["b_qkv"], tm_target=tm_target)
    qkv = qkv.reshape(bsz, seq, h, 3 * dh)
    q = jnp.transpose(qkv[..., :dh], (0, 2, 1, 3))
    k = jnp.transpose(qkv[..., dh:2 * dh], (0, 2, 1, 3))
    v = jnp.transpose(qkv[..., 2 * dh:], (0, 2, 1, 3))

    # scaled-dot-product attention over (batch, head) slices
    ctx = _attention(q, k, v)                                   # (B, H, S, Dh)
    ctx2d = jnp.transpose(ctx, (0, 2, 1, 3)).reshape(m, h * dh)

    # output projection + first residual
    x1 = _out_proj_residual(ctx2d, params["w_o"], params["b_o"], x2d,
                            tm_target=tm_target)

    # LN2 + FFN + second residual
    y2d = _ln2_ffn_residual(x1, params["ln2_g"], params["ln2_b"],
                            params["w1"], params["b1"],
                            params["w2"], params["b2"],
                            tm_target=tm_target, tf_target=tf_target)
    return y2d.reshape(bsz, seq, d)


# ----------------------------------------------------------------------------
# parameter init (torch.nn.Linear-style) + pure-JAX reference
# ----------------------------------------------------------------------------
def _init_linear(key, in_features, out_features):
    kw, kb = jax.random.split(key)
    bound = 1.0 / math.sqrt(in_features)
    w = jax.random.uniform(kw, (in_features, out_features), jnp.float32,
                           minval=-bound, maxval=bound)
    b = jax.random.uniform(kb, (out_features,), jnp.float32,
                           minval=-bound, maxval=bound)
    return w, b


def init_transformer_block_params(key, n_heads, d_model, d_head, d_ff):
    ks = jax.random.split(key, 8)
    w_qkv, b_qkv = _init_linear(ks[0], d_model, 3 * n_heads * d_head)
    w_o, b_o = _init_linear(ks[1], n_heads * d_head, d_model)
    w1, b1 = _init_linear(ks[2], d_model, d_ff)
    w2, b2 = _init_linear(ks[3], d_ff, d_model)
    ln1_g = 1.0 + 0.1 * jax.random.normal(ks[4], (d_model,), jnp.float32)
    ln1_b = 0.1 * jax.random.normal(ks[5], (d_model,), jnp.float32)
    ln2_g = 1.0 + 0.1 * jax.random.normal(ks[6], (d_model,), jnp.float32)
    ln2_b = 0.1 * jax.random.normal(ks[7], (d_model,), jnp.float32)
    return dict(n_heads=n_heads, d_head=d_head,
                w_qkv=w_qkv, b_qkv=b_qkv, w_o=w_o, b_o=b_o,
                w1=w1, b1=b1, w2=w2, b2=b2,
                ln1_g=ln1_g, ln1_b=ln1_b, ln2_g=ln2_g, ln2_b=ln2_b)


def transformer_block_reference(x, p):
    hp = jax.lax.Precision.HIGHEST

    def ln(a, g, b):
        mu = a.mean(-1, keepdims=True)
        var = ((a - mu) ** 2).mean(-1, keepdims=True)
        return (a - mu) / jnp.sqrt(var + _LN_EPS) * g + b

    bsz, seq, d = x.shape
    h, dh = p["n_heads"], p["d_head"]
    xn = ln(x, p["ln1_g"], p["ln1_b"]).reshape(bsz * seq, d)
    qkv = jnp.dot(xn, p["w_qkv"], precision=hp) + p["b_qkv"]
    qkv = qkv.reshape(bsz, seq, h, 3 * dh)
    q = jnp.transpose(qkv[..., :dh], (0, 2, 1, 3))
    k = jnp.transpose(qkv[..., dh:2 * dh], (0, 2, 1, 3))
    v = jnp.transpose(qkv[..., 2 * dh:], (0, 2, 1, 3))
    s = jnp.einsum("bhqd,bhkd->bhqk", q, k, precision=hp) / math.sqrt(dh)
    w = jax.nn.softmax(s, axis=-1)
    ctx = jnp.einsum("bhqk,bhkd->bhqd", w, v, precision=hp)
    ctx = jnp.transpose(ctx, (0, 2, 1, 3)).reshape(bsz * seq, h * dh)
    attn = jnp.dot(ctx, p["w_o"], precision=hp) + p["b_o"]
    x1 = x + attn.reshape(bsz, seq, d)
    h2 = ln(x1, p["ln2_g"], p["ln2_b"]).reshape(bsz * seq, d)
    hh = jnp.dot(h2, p["w1"], precision=hp) + p["b1"]
    hh = 0.5 * hh * (1.0 + lax.erf(hh / math.sqrt(2.0)))
    mlp = jnp.dot(hh, p["w2"], precision=hp) + p["b2"]
    return x1 + mlp.reshape(bsz, seq, d)


if __name__ == "__main__":
    batch, seq = 2, 8
    n_heads, d_head = 2, 16
    d_model, d_ff = 32, 64

    key = jax.random.PRNGKey(0)
    kx, kp = jax.random.split(key)
    x = jax.random.normal(kx, (batch, seq, d_model), jnp.float32)
    params = init_transformer_block_params(kp, n_heads, d_model, d_head, d_ff)

    y = transformer_block(x, params)
    y = jax.block_until_ready(y)

    y_ref = transformer_block_reference(x, params)
    assert y.shape == x.shape
    assert bool(jnp.all(jnp.isfinite(y))), "non-finite output"
    max_err = float(jnp.max(jnp.abs(y - y_ref)))
    assert jnp.allclose(y, y_ref, atol=1e-3, rtol=1e-3), (
        f"mismatch vs reference (max abs err {max_err})")

    print("KERNEL_OK")
</pallas_src>

<mosaic_0001>
module attributes {stable_mosaic.version = 11 : i64} {
  func.func @_ln_qkv_kernel(%arg0: i32, %arg1: memref<16x32xf32, #tpu.memory_space<vmem>>, %arg2: memref<1x32xf32, #tpu.memory_space<vmem>>, %arg3: memref<1x32xf32, #tpu.memory_space<vmem>>, %arg4: memref<32x96xf32, #tpu.memory_space<vmem>>, %arg5: memref<1x96xf32, #tpu.memory_space<vmem>>, %arg6: memref<16x96xf32, #tpu.memory_space<vmem>>) attributes {dimension_semantics = [#tpu.dimension_semantics<parallel>], iteration_bounds = array<i64: 1>, scalar_prefetch = 0 : i64, scratch_operands = 0 : i64, tpu.core_type = #tpu.core_type<tc>, window_params = [{transform_indices = @transform_0, window_bounds = array<i64: 16, 32>}, {pipeline_mode = #tpu.pipeline_mode<synchronous>, transform_indices = @transform_1, window_bounds = array<i64: 1, 32>}, {pipeline_mode = #tpu.pipeline_mode<synchronous>, transform_indices = @transform_2, window_bounds = array<i64: 1, 32>}, {pipeline_mode = #tpu.pipeline_mode<synchronous>, transform_indices = @transform_3, window_bounds = array<i64: 32, 96>}, {pipeline_mode = #tpu.pipeline_mode<synchronous>, transform_indices = @transform_4, window_bounds = array<i64: 1, 96>}, {transform_indices = @transform_5, window_bounds = array<i64: 16, 96>}]} {
    %c0 = arith.constant 0 : index
    %c0_0 = arith.constant 0 : index
    %0 = vector.load %arg1[%c0, %c0_0] : memref<16x32xf32, #tpu.memory_space<vmem>>, vector<16x32xf32>
    %cst = arith.constant dense<0.000000e+00> : vector<16xf32>
    %1 = vector.multi_reduction <add>, %0, %cst [1] : vector<16x32xf32> to vector<16xf32>
    %2 = vector.shape_cast %1 : vector<16xf32> to vector<16x1xf32>
    %cst_1 = arith.constant 3.200000e+01 : f32
    %3 = vector.broadcast %cst_1 : f32 to vector<16x1xf32>
    %4 = arith.divf %2, %3 : vector<16x1xf32>
    %5 = vector.broadcast %4 : vector<16x1xf32> to vector<16x32xf32>
    %6 = arith.subf %0, %5 : vector<16x32xf32>
    %7 = arith.mulf %6, %6 : vector<16x32xf32>
    %cst_2 = arith.constant dense<0.000000e+00> : vector<16xf32>
    %8 = vector.multi_reduction <add>, %7, %cst_2 [1] : vector<16x32xf32> to vector<16xf32>
    %9 = vector.shape_cast %8 : vector<16xf32> to vector<16x1xf32>
    %cst_3 = arith.constant 3.200000e+01 : f32
    %10 = vector.broadcast %cst_3 : f32 to vector<16x1xf32>
    %11 = arith.divf %9, %10 : vector<16x1xf32>
    %12 = vector.broadcast %4 : vector<16x1xf32> to vector<16x32xf32>
    %13 = arith.subf %0, %12 : vector<16x32xf32>
    %cst_4 = arith.constant 9.99999974E-6 : f32
    %14 = vector.broadcast %cst_4 : f32 to vector<16x1xf32>
    %15 = arith.addf %11, %14 : vector<16x1xf32>
    %16 = math.rsqrt %15 : vector<16x1xf32>
    %17 = vector.broadcast %16 : vector<16x1xf32> to vector<16x32xf32>
    %18 = arith.mulf %13, %17 : vector<16x32xf32>
    %c0_5 = arith.constant 0 : index
    %c0_6 = arith.constant 0 : index
    %19 = vector.load %arg2[%c0_5, %c0_6] : memref<1x32xf32, #tpu.memory_space<vmem>>, vector<1x32xf32>
    %20 = vector.broadcast %19 : vector<1x32xf32> to vector<16x32xf32>
    %21 = arith.mulf %18, %20 : vector<16x32xf32>
    %c0_7 = arith.constant 0 : index
    %c0_8 = arith.constant 0 : index
    %22 = vector.load %arg3[%c0_7, %c0_8] : memref<1x32xf32, #tpu.memory_space<vmem>>, vector<1x32xf32>
    %23 = vector.broadcast %22 : vector<1x32xf32> to vector<16x32xf32>
    %24 = arith.addf %21, %23 : vector<16x32xf32>
    %c0_9 = arith.constant 0 : index
    %c0_10 = arith.constant 0 : index
    %25 = vector.load %arg4[%c0_9, %c0_10] : memref<32x96xf32, #tpu.memory_space<vmem>>, vector<32x96xf32>
    %cst_11 = arith.constant dense<0.000000e+00> : vector<16x96xf32>
    %26 = tpu.matmul %24, %25, %cst_11 {dimension_numbers = #tpu.dot_dimension_numbers<[1], [0], [0], [1], [0, 0, 1, 1], [], []>} : vector<16x32xf32>, vector<32x96xf32>, vector<16x96xf32> -> vector<16x96xf32>
    %c0_12 = arith.constant 0 : index
    %c0_13 = arith.constant 0 : index
    %27 = vector.load %arg5[%c0_12, %c0_13] : memref<1x96xf32, #tpu.memory_space<vmem>>, vector<1x96xf32>
    %28 = vector.broadcast %27 : vector<1x96xf32> to vector<16x96xf32>
    %29 = arith.addf %26, %28 : vector<16x96xf32>
    %c0_14 = arith.constant 0 : index
    %c0_15 = arith.constant 0 : index
    %30 = vector.load %arg6[%c0_14, %c0_15] : memref<16x96xf32, #tpu.memory_space<vmem>>, vector<16x96xf32>
    tpu.vector_store %arg6[%c0_14, %c0_15], %29 {strides = array<i32>} : memref<16x96xf32, #tpu.memory_space<vmem>>, vector<16x96xf32>,
    return
  }
  func.func @transform_0(%arg0: i32) -> (i32, i32) {
    %c0_i32 = arith.constant 0 : i32
    %c0_i32_0 = arith.constant 0 : i32
    return %arg0, %c0_i32 : i32, i32
  }
  func.func @transform_1(%arg0: i32) -> (i32, i32) {
    %c0_i32 = arith.constant 0 : i32
    %c0_i32_0 = arith.constant 0 : i32
    %c0_i32_1 = arith.constant 0 : i32
    return %c0_i32, %c0_i32_0 : i32, i32
  }
  func.func @transform_2(%arg0: i32) -> (i32, i32) {
    %c0_i32 = arith.constant 0 : i32
    %c0_i32_0 = arith.constant 0 : i32
    %c0_i32_1 = arith.constant 0 : i32
    return %c0_i32, %c0_i32_0 : i32, i32
  }
  func.func @transform_3(%arg0: i32) -> (i32, i32) {
    %c0_i32 = arith.constant 0 : i32
    %c0_i32_0 = arith.constant 0 : i32
    %c0_i32_1 = arith.constant 0 : i32
    return %c0_i32, %c0_i32_0 : i32, i32
  }
  func.func @transform_4(%arg0: i32) -> (i32, i32) {
    %c0_i32 = arith.constant 0 : i32
    %c0_i32_0 = arith.constant 0 : i32
    %c0_i32_1 = arith.constant 0 : i32
    return %c0_i32, %c0_i32_0 : i32, i32
  }
  func.func @transform_5(%arg0: i32) -> (i32, i32) {
    %c0_i32 = arith.constant 0 : i32
    %c0_i32_0 = arith.constant 0 : i32
    return %arg0, %c0_i32 : i32, i32
  }
}

</mosaic_0001>

<llo_original>
// kernel: tpu_custom_call.1
$region0: #{tpu_custom_call.1}
  #allocation0 [shape = 'u32[]', space=smem, size = 0x4, offset = 0x4, fixed_abs, tag = 'smem constant byte address 0x4 - core index']
  #allocation1 [shape = 'u32[144,128]{1,0:T(1,128)}', space=vmem, size = 0x12000, scoped, tag = 'internal scratch']
  %s0 = inlined_call_operand.hbm [shape: f32[16,32], index: 0, kind: input, shape index: {}]
  %s1 = inlined_call_operand.hbm [shape: f32[1,32], index: 1, kind: input, shape index: {}]
  %s2 = inlined_call_operand.hbm [shape: f32[1,32], index: 2, kind: input, shape index: {}]
  %s3 = inlined_call_operand.hbm [shape: f32[32,96], index: 3, kind: input, shape index: {}]
  %s4 = inlined_call_operand.hbm [shape: f32[1,96], index: 4, kind: input, shape index: {}]
  %s5 = inlined_call_operand.hbm [shape: f32[16,96], index: 5, kind: output, shape index: {}]
  %s6 = sld [smem:[#allocation0]]
  $region50: #{tpu_custom_call.1} parent=0
    _
  %s8 = ssub.s32 1, %s6
  %s9 = scalar_select 0, %s8, %s6
  $region1: #{tpu_custom_call.1} parent=0
    #allocation2 [shape = 'u8[8192]{0}', space=vmem, size = 0x2000, scoped, tag = 'input window, operand 0, single buffered']
    #allocation3 [shape = 's32[1]{0}', space=sflag, size = 0x4, scoped, tag = 'scoped memory for tpu_custom_call.1']
    #allocation4 [shape = 's32[1]{0}', space=sflag, size = 0x4, scoped, tag = 'scoped memory for tpu_custom_call.1']
    #allocation5 [shape = 'u8[512]{0}', space=vmem, size = 0x400, scoped, tag = 'input window, operand 1, single buffered']
    #allocation6 [shape = 's32[1]{0}', space=sflag, size = 0x4, scoped, tag = 'scoped memory for tpu_custom_call.1']
    #allocation7 [shape = 'u8[512]{0}', space=vmem, size = 0x400, scoped, tag = 'input window, operand 2, single buffered']
    #allocation8 [shape = 'u8[16384]{0}', space=vmem, size = 0x4000, scoped, tag = 'input window, operand 3, single buffered']
    #allocation9 [shape = 's32[1]{0}', space=sflag, size = 0x4, scoped, tag = 'scoped memory for tpu_custom_call.1']
    #allocation10 [shape = 'u8[512]{0}', space=vmem, size = 0x400, scoped, tag = 'input window, operand 4, single buffered']
    #allocation11 [shape = 'u8[8192]{0}', space=vmem, size = 0x2000, scoped, tag = 'output window, operand 0, single buffered']
    %10 = vsyncpa [#allocation3], 0
    %11 = vsyncpa [#allocation6], 0
    %12 = vsyncpa [#allocation9], 0
    %13 = vsyncpa [#allocation4], 0
    // Predicated region
    $region2: #{tpu_custom_call.1} parent=1 // pred_check
      _
    $region3: #{tpu_custom_call.1} parent=1 // pred_check_branch
      %15 = sbr.rel (0) target = $region5
    $region4: #{tpu_custom_call.1} parent=1 // pred_region
      %s17 = ssub.s32 256, 256
      %18 = vsyncadd [#allocation3], %s17
      %s19 = sshll.u32 [#allocation2], 4
      %s20 = int_to_ptr.vmem [resolvable:$true] %s19
      %25 = dma.hbm_to_vmem [thread:$0]  %s0, 256, %s20, [#allocation3], 128, 128, 8
    $region5: #{tpu_custom_call.1} parent=1 // pred_fallthru
      _
    // Predicated region
    $region6: #{tpu_custom_call.1} parent=1 // pred_check
      _
    $region7: #{tpu_custom_call.1} parent=1 // pred_check_branch
      %27 = sbr.rel (0) target = $region9
    $region8: #{tpu_custom_call.1} parent=1 // pred_region
      %s29 = ssub.s32 16, 16
      %30 = vsyncadd [#allocation6], %s29
      %s32 = sshll.u32 [#allocation5], 4
      %s33 = int_to_ptr.vmem [resolvable:$true] %s32
      %35 = dma.hbm_to_vmem [thread:$0]  %s1, 16, %s33, [#allocation6]
    $region9: #{tpu_custom_call.1} parent=1 // pred_fallthru
      _
    // Predicated region
    $region10: #{tpu_custom_call.1} parent=1 // pred_check
      _
    $region11: #{tpu_custom_call.1} parent=1 // pred_check_branch
      %37 = sbr.rel (0) target = $region13
    $region12: #{tpu_custom_call.1} parent=1 // pred_region
      %s39 = ssub.s32 16, 16
      %40 = vsyncadd [#allocation6], %s39
      %s42 = sshll.u32 [#allocation7], 4
      %s43 = int_to_ptr.vmem [resolvable:$true] %s42
      %45 = dma.hbm_to_vmem [thread:$0]  %s2, 16, %s43, [#allocation6]
    $region13: #{tpu_custom_call.1} parent=1 // pred_fallthru
      _
    // Predicated region
    $region14: #{tpu_custom_call.1} parent=1 // pred_check
      _
    $region15: #{tpu_custom_call.1} parent=1 // pred_check_branch
      %47 = sbr.rel (0) target = $region17
    $region16: #{tpu_custom_call.1} parent=1 // pred_region
      %s49 = ssub.s32 512, 512
      %50 = vsyncadd [#allocation9], %s49
      %s51 = sshll.u32 [#allocation8], 4
      %s52 = int_to_ptr.vmem [resolvable:$true] %s51
      %57 = dma.hbm_to_vmem [thread:$0]  %s3, 512, %s52, [#allocation9], 128, 128, 8
    $region17: #{tpu_custom_call.1} parent=1 // pred_fallthru
      _
    // Predicated region
    $region18: #{tpu_custom_call.1} parent=1 // pred_check
      _
    $region19: #{tpu_custom_call.1} parent=1 // pred_check_branch
      %59 = sbr.rel (0) target = $region21
    $region20: #{tpu_custom_call.1} parent=1 // pred_region
      %s61 = ssub.s32 16, 16
      %62 = vsyncadd [#allocation9], %s61
      %s64 = sshll.u32 [#allocation10], 4
      %s65 = int_to_ptr.vmem [resolvable:$true] %s64
      %67 = dma.hbm_to_vmem [thread:$0]  %s4, 16, %s65, [#allocation9]
    $region21: #{tpu_custom_call.1} parent=1 // pred_fallthru
      _
    // Predicated region
    $region22: #{tpu_custom_call.1} parent=1 // pred_check
      _
    $region23: #{tpu_custom_call.1} parent=1 // pred_check_branch
      %69 = sbr.rel (0) target = $region25
    $region24: #{tpu_custom_call.1} parent=1 // pred_region
      %70 = dma.done [#allocation3], 256
    $region25: #{tpu_custom_call.1} parent=1 // pred_fallthru
      _
    // Predicated region
    $region26: #{tpu_custom_call.1} parent=1 // pred_check
      _
    $region27: #{tpu_custom_call.1} parent=1 // pred_check_branch
      %72 = sbr.rel (0) target = $region29
    $region28: #{tpu_custom_call.1} parent=1 // pred_region
      %73 = dma.done [#allocation6], 16
    $region29: #{tpu_custom_call.1} parent=1 // pred_fallthru
      _
    // Predicated region
    $region30: #{tpu_custom_call.1} parent=1 // pred_check
      _
    $region31: #{tpu_custom_call.1} parent=1 // pred_check_branch
      %75 = sbr.rel (0) target = $region33
    $region32: #{tpu_custom_call.1} parent=1 // pred_region
      %76 = dma.done [#allocation6], 16
    $region33: #{tpu_custom_call.1} parent=1 // pred_fallthru
      _
    // Predicated region
    $region34: #{tpu_custom_call.1} parent=1 // pred_check
      _
    $region35: #{tpu_custom_call.1} parent=1 // pred_check_branch
      %78 = sbr.rel (0) target = $region37
    $region36: #{tpu_custom_call.1} parent=1 // pred_region
      %79 = dma.done [#allocation9], 512
    $region37: #{tpu_custom_call.1} parent=1 // pred_fallthru
      _
    // Predicated region
    $region38: #{tpu_custom_call.1} parent=1 // pred_check
      _
    $region39: #{tpu_custom_call.1} parent=1 // pred_check_branch
      %81 = sbr.rel (0) target = $region41
    $region40: #{tpu_custom_call.1} parent=1 // pred_region
      %82 = dma.done [#allocation9], 16
    $region41: #{tpu_custom_call.1} parent=1 // pred_fallthru
      _
    %v83 = vld [vmem:[#allocation2] sm:$0xff]
    %v84 = vld [vmem:[#allocation2 + $0x8] sm:$0xff]
    %vm85 = vcmask 261120
    %v86 = vsel %vm85, %v83, 0.0
    %87 = vadd.xlane.f32.xlu0 %v86
    %v88 = vpop.xlane.xlu0 %87
    %v89 = vsel %vm85, %v84, 0.0
    %90 = vadd.xlane.f32.xlu0 %v89
    %v91 = vpop.xlane.xlu0 %90
    %v92 = vrcp.pop 32.0
    %v93 = vmul.f32 %v88, %v92
    %v94 = vmul.f32 %v91, %v92
    %v95 = vsub.f32 %v83, %v93
    %v96 = vsub.f32 %v84, %v94
    %v97 = vmul.f32 %v95, %v95
    %v98 = vmul.f32 %v96, %v96
    %v99 = vsel %vm85, %v97, 0.0
    %100 = vadd.xlane.f32.xlu0 %v99
    %v101 = vpop.xlane.xlu0 %100
    %v102 = vsel %vm85, %v98, 0.0
    %103 = vadd.xlane.f32.xlu0 %v102
    %v104 = vpop.xlane.xlu0 %103
    %v105 = vmul.f32 %v101, %v92
    %v106 = vmul.f32 %v104, %v92
    %v107 = vadd.f32 %v105, 1e-05
    %v108 = vadd.f32 %v106, 1e-05
    %v109 = vrsqrt.pop %v107
    %v110 = vrsqrt.pop %v108
    %v111 = vmul.f32 %v95, %v109
    %v112 = vmul.f32 %v96, %v110
    %v113 = vld [vmem:[#allocation5] sm:$0x1]
    %v115 = vlaneseq
    %v116 = vshrl.u32 %v115, 7
    %v117 = vsub.s32 0, %v116
    %v118 = vrot.slane %v113, %v117
    %v120 = vmul.f32 %v111, %v118
    %v121 = vmul.f32 %v112, %v118
    %v122 = vld [vmem:[#allocation7] sm:$0x1]
    %v124 = vlaneseq
    %v125 = vshrl.u32 %v124, 7
    %v126 = vsub.s32 0, %v125
    %v127 = vrot.slane %v122, %v126
    %v129 = vadd.f32 %v120, %v127
    %v130 = vadd.f32 %v121, %v127
    %v131 = vld [vmem:[#allocation8] sm:$0xff]
    %v132 = vld [vmem:[#allocation8 + $0x8] sm:$0xff]
    %v133 = vld [vmem:[#allocation8 + $0x10] sm:$0xff]
    %v134 = vld [vmem:[#allocation8 + $0x18] sm:$0xff]
    %v135 = vld [vmem:[#allocation10] sm:$0x1]
    %v137 = vlaneseq
    %v138 = vshrl.u32 %v137, 7
    %v139 = vsub.s32 0, %v138
    %v140 = vrot.slane %v135, %v139
    %v143 = vsel %vm85, %v129, 0
    %v146 = vsel %vm85, %v130, 0
    %148 = vmatprep.subr.mxu0 0.0
    %149 = vmatpush1.msra.mxu0 %v131
    %150 = vmatprep.subr.mxu0 0.0
    %151 = vmatpush1.msra.mxu0 %v132
    %152 = vmatprep.subr.mxu0 0.0
    %153 = vmatpush1.msra.mxu0 %v133
    %154 = vmatprep.subr.mxu0 0.0
    %155 = vmatpush1.msra.mxu0 %v134
    %156 = vmatprep.subr.mxu0 0.0
    %157 = vmatpush1.msra.mxu0 0.0
    %158 = vmatprep.subr.mxu0 0.0
    %159 = vmatpush1.msra.mxu0 0.0
    %160 = vmatprep.subr.mxu0 0.0
    %161 = vmatpush1.msra.mxu0 0.0
    %162 = vmatprep.subr.mxu0 0.0
    %163 = vmatpush1.msra.mxu0 0.0
    %164 = vmatprep.subr.mxu0 0.0
    %165 = vmatpush1.msra.mxu0 0.0
    %166 = vmatprep.subr.mxu0 0.0
    %167 = vmatpush1.msra.mxu0 0.0
    %168 = vmatprep.subr.mxu0 0.0
    %169 = vmatpush1.msra.mxu0 0.0
    %170 = vmatprep.subr.mxu0 0.0
    %171 = vmatpush1.msra.mxu0 0.0
    %172 = vmatprep.subr.mxu0 0.0
    %173 = vmatpush1.msra.mxu0 0.0
    %174 = vmatprep.subr.mxu0 0.0
    %175 = vmatpush1.msra.mxu0 0.0
    %176 = vmatprep.subr.mxu0 0.0
    %177 = vmatpush1.msra.mxu0 0.0
    %178 = vmatprep.subr.mxu0 0.0
    %179 = vmatpush1.msra.mxu0 0.0
    %180 = vmatprep.subr.mxu0 0.0
    %181 = vmatpush1.msra.mxu0 0.0
    %182 = vmatprep.subr.mxu0 0.0
    %183 = vmatpush1.msra.mxu0 0.0
    %184 = vmatprep.subr.mxu0 0.0
    %185 = vmatpush1.msra.mxu0 0.0
    %186 = vmatprep.subr.mxu0 0.0
    %187 = vmatpush1.msra.mxu0 0.0
    %188 = vmatprep.subr.mxu0 0.0
    %189 = vmatpush1.msra.mxu0 0.0
    %190 = vmatprep.subr.mxu0 0.0
    %191 = vmatpush1.msra.mxu0 0.0
    %192 = vmatprep.subr.mxu0 0.0
    %193 = vmatpush1.msra.mxu0 0.0
    %194 = vmatprep.subr.mxu0 0.0
    %195 = vmatpush1.msra.mxu0 0.0
    %196 = vmatprep.subr.mxu0 0.0
    %197 = vmatpush1.msra.mxu0 0.0
    %198 = vmatprep.subr.mxu0 0.0
    %199 = vmatpush1.msra.mxu0 0.0
    %200 = vmatprep.subr.mxu0 0.0
    %201 = vmatpush1.msra.mxu0 0.0
    %202 = vmatprep.subr.mxu0 0.0
    %203 = vmatpush1.msra.mxu0 0.0
    %204 = vmatprep.subr.mxu0 0.0
    %205 = vmatpush1.msra.mxu0 0.0
    %206 = vmatprep.subr.mxu0 0.0
    %207 = vmatpush1.msra.mxu0 0.0
    %208 = vmatprep.subr.mxu0 0.0
    %209 = vmatpush1.msra.mxu0 0.0
    %210 = vmatprep.subr.mxu0 0.0
    %211 = vmatpush1.msra.mxu0 0.0
    %212 = vmatprep.mubr.f32.mxu0 0.0
    %213 = vmatmul.mubr.f32.gmra.mrb[0].mxu0 %v143
    %v214 = vpop.f32.mrb[0].mxu0
    %v215 = vadd.f32 %v140, %v214
    %v216 = vpop.f32.mrb[0].mxu0
    %217 = vmatprep.mubr.f32.mxu0 0.0
    %218 = vmatmul.mubr.f32.gmra.mrb[0].mxu0 %v146
    %v219 = vpop.f32.mrb[0].mxu0
    %v220 = vadd.f32 %v140, %v219
    %v221 = vpop.f32.mrb[0].mxu0
    %222 = vdwg.mxu0
    %vm223 = vcmask 785408
    %224 = vst.msk [vmem:[#allocation11] sm:$0xff] %vm223, %v215
    %225 = vst.msk [vmem:[#allocation11 + $0x8] sm:$0xff] %vm223, %v220
    // Predicated region
    $region42: #{tpu_custom_call.1} parent=1 // pred_check
      _
    $region43: #{tpu_custom_call.1} parent=1 // pred_check_branch
      %227 = sbr.rel (0) target = $region45
    $region44: #{tpu_custom_call.1} parent=1 // pred_region
      %s229 = ssub.s32 256, 256
      %230 = vsyncadd [#allocation4], %s229
      %s231 = sshll.u32 [#allocation11], 4
      %s232 = int_to_ptr.vmem [resolvable:$true] %s231
      %237 = dma.vmem_to_hbm [thread:$0]  %s232, 256, %s5, [#allocation4], 128, 128, 8
    $region45: #{tpu_custom_call.1} parent=1 // pred_fallthru
      _
    // Predicated region
    $region46: #{tpu_custom_call.1} parent=1 // pred_check
      _
    $region47: #{tpu_custom_call.1} parent=1 // pred_check_branch
      %239 = sbr.rel (0) target = $region49
    $region48: #{tpu_custom_call.1} parent=1 // pred_region
      %240 = dma.done [#allocation4], 256
    $region49: #{tpu_custom_call.1} parent=1 // pred_fallthru
      _
    %241 = vsyncpa [#allocation3], 1
    %242 = vsyncpa [#allocation6], 1
    %243 = vsyncpa [#allocation9], 1
    %244 = vsyncpa [#allocation4], 1

</llo_original>
